<compile_context>
chip_gen: v7x
topology: tpu7x:2x2x1
jax: 0.10.0
libtpu: 0.0.40
codegen_flags: <defaults>
</compile_context>

<pallas_src>
import functools

import jax
import jax.numpy as jnp
from jax import lax
from jax.experimental import pallas as pl
from jax.experimental.pallas import tpu as pltpu


def _actor_kernel(obs_ref, w1_ref, b1_ref, w2_ref, b2_ref, wh_ref, bh_ref,
                  o_ref):
    """One batch tile of the actor MLP. obs/w1/w2 may be bf16; math is f32."""
    x = obs_ref[...]                                              # (TB, Dp)
    h1 = jnp.dot(x, w1_ref[...], preferred_element_type=jnp.float32)
    h1 = jnp.maximum(h1 + b1_ref[...], 0.0)                       # (TB, H) f32
    h2 = jnp.dot(h1.astype(w2_ref.dtype), w2_ref[...],
                 preferred_element_type=jnp.float32)
    h2 = jnp.maximum(h2 + b2_ref[...], 0.0)                       # (TB, H) f32

    # Both heads as one tiny MXU matmul: (2, H) . (TB, H)^T -> (2, TB).
    # Result is already lane-dense for the (2, TB) output block; the MXU is
    # otherwise idle after layer 2, so this is essentially free and removes
    # the double VPU pass + XLU reductions of the previous version.
    heads = lax.dot_general(
        wh_ref[...], h2,
        dimension_numbers=(((1,), (1,)), ((), ())),
        preferred_element_type=jnp.float32) + bh_ref[...]         # (2, TB)

    # Row 0 -> sigmoid (stable form, no inf intermediate), row 1 -> tanh.
    e = jnp.exp(-jnp.abs(heads))                                  # EUP
    r = 1.0 / (1.0 + e)
    sig = jnp.where(heads >= 0.0, r, e * r)
    row = lax.broadcasted_iota(jnp.int32, heads.shape, 0)
    o_ref[...] = jnp.where(row == 0, sig, jnp.tanh(heads))        # one store


def _round_up(x, m):
    return ((x + m - 1) // m) * m


@functools.partial(jax.jit,
                   static_argnames=("batch_tile", "use_bf16", "num_cores"))
def actor_forward(obs, params, *, batch_tile=512, use_bf16=True, num_cores=1):
    """Pallas implementation of Actor.forward(obs) -> (B, 2).

    num_cores: set to 2 on v7x (2 TensorCores/chip) so large batches are split
    into >=2 parallel grid steps; leave at 1 on v5e/v6e.
    """
    w1, b1, w2, b2, w_lin, b_lin, w_ang, b_ang = params
    B, D = obs.shape
    H = w1.shape[1]                                   # 256

    # ---- tile selection -----------------------------------------------------
    tile = batch_tile
    if num_cores > 1 and B > 128 * num_cores:
        # Ensure at least `num_cores` parallel grid steps (megacore sharding).
        tile = min(tile, _round_up(pl.cdiv(B, num_cores), 128))
    if B <= tile:
        # RL-size inference: clamp the tile to the real batch (sublane-aligned)
        # so we don't burn 32x the MXU/VPU work padding 8 rows to 512.
        tile = max(_round_up(B, 16), 16)
        num_tiles = 1
    else:
        # Multi-tile: output block lane dim must be a multiple of 128.
        tile = _round_up(tile, 128)
        num_tiles = pl.cdiv(B, tile)
    B_pad = num_tiles * tile

    # ---- operand prep -------------------------------------------------------
    mm_dtype = jnp.bfloat16 if use_bf16 else jnp.float32
    d_mult = 32 if use_bf16 else 8          # bf16 sublane packing / K alignment
    D_pad = _round_up(D, d_mult)

    obs_p = obs.astype(jnp.float32)
    if (B_pad, D_pad) != (B, D):
        obs_p = jnp.pad(obs_p, ((0, B_pad - B), (0, D_pad - D)))
    obs_p = obs_p.astype(mm_dtype)

    w1c = w1.astype(jnp.float32)
    if D_pad != D:
        w1c = jnp.pad(w1c, ((0, D_pad - D), (0, 0)))   # zero rows: no-op math
    w1c = w1c.astype(mm_dtype)
    w2c = w2.astype(mm_dtype)

    b1r = b1.reshape(1, H).astype(jnp.float32)
    b2r = b2.reshape(1, H).astype(jnp.float32)
    # Head weights packed as lane rows (2, H); head biases as a (2, 1) column.
    w_heads = jnp.concatenate(
        [w_lin.reshape(1, H), w_ang.reshape(1, H)], axis=0).astype(jnp.float32)
    b_heads = jnp.stack(
        [b_lin.reshape(()), b_ang.reshape(())]).reshape(2, 1).astype(jnp.float32)

    out = pl.pallas_call(
        _actor_kernel,
        out_shape=jax.ShapeDtypeStruct((2, B_pad), jnp.float32),
        grid_spec=pltpu.PrefetchScalarGridSpec(
            num_scalar_prefetch=0,
            grid=(num_tiles,),
            in_specs=[
                pl.BlockSpec((tile, D_pad), lambda i: (i, 0)),    # obs tile
                pl.BlockSpec((D_pad, H), lambda i: (0, 0)),       # w1
                pl.BlockSpec((1, H), lambda i: (0, 0)),           # b1
                pl.BlockSpec((H, H), lambda i: (0, 0)),           # w2
                pl.BlockSpec((1, H), lambda i: (0, 0)),           # b2
                pl.BlockSpec((2, H), lambda i: (0, 0)),           # head weights
                pl.BlockSpec((2, 1), lambda i: (0, 0)),           # head biases
            ],
            out_specs=pl.BlockSpec((2, tile), lambda i: (0, i)),
        ),
        compiler_params=pltpu.CompilerParams(
            dimension_semantics=("parallel",)),
    )(obs_p, w1c, b1r, w2c, b2r, w_heads, b_heads)

    return out[:, :B].T                                             # (B, 2)


def init_actor_params(key, obs_dim, hidden=256):
    """Deterministic init mimicking nn.Linear default U[-1/sqrt(fan_in), +]."""
    def linear(k, fan_in, fan_out):
        kw, kb = jax.random.split(k)
        bound = 1.0 / jnp.sqrt(jnp.float32(fan_in))
        w = jax.random.uniform(kw, (fan_in, fan_out), jnp.float32, -bound, bound)
        b = jax.random.uniform(kb, (fan_out,), jnp.float32, -bound, bound)
        return w, b

    k1, k2, k3, k4 = jax.random.split(key, 4)
    w1, b1 = linear(k1, obs_dim, hidden)
    w2, b2 = linear(k2, hidden, hidden)
    w_lin, b_lin = linear(k3, hidden, 1)
    w_ang, b_ang = linear(k4, hidden, 1)
    return (w1, b1, w2, b2, w_lin, b_lin, w_ang, b_ang)


def _actor_ref(obs, params):
    """Pure-JAX reference for correctness checking."""
    w1, b1, w2, b2, w_lin, b_lin, w_ang, b_ang = params
    h = jax.nn.relu(obs @ w1 + b1)
    h = jax.nn.relu(h @ w2 + b2)
    lin = jax.nn.sigmoid(h @ w_lin + b_lin)
    ang = jnp.tanh(h @ w_ang + b_ang)
    return jnp.concatenate([lin, ang], axis=-1)


if __name__ == "__main__":
    key = jax.random.PRNGKey(0)
    obs_dim = 24                                # turtlebot3-like observation
    kp, ko1, ko2 = jax.random.split(key, 3)
    params = init_actor_params(kp, obs_dim)

    # RL-size batch (clamped single tile): f32 exact path + default bf16 path.
    obs_small = jax.random.normal(ko1, (8, obs_dim), jnp.float32)
    ref_small = _actor_ref(obs_small, params)
    vel_f32 = jax.block_until_ready(
        actor_forward(obs_small, params, use_bf16=False))
    assert vel_f32.shape == (8, 2), vel_f32.shape
    assert jnp.allclose(vel_f32, ref_small, atol=1e-4, rtol=1e-4)
    vel_bf16 = jax.block_until_ready(actor_forward(obs_small, params))
    assert jnp.allclose(vel_bf16, ref_small, atol=5e-2, rtol=5e-2)

    # Larger, non-multiple batch.
    obs_big = jax.random.normal(ko2, (300, obs_dim), jnp.float32)
    ref_big = _actor_ref(obs_big, params)
    vel_big = jax.block_until_ready(
        actor_forward(obs_big, params, use_bf16=False))
    assert vel_big.shape == (300, 2), vel_big.shape
    assert jnp.allclose(vel_big, ref_big, atol=1e-4, rtol=1e-4)
    vel_big_bf = jax.block_until_ready(actor_forward(obs_big, params))
    assert jnp.allclose(vel_big_bf, ref_big, atol=5e-2, rtol=5e-2)

    # v7x-style 2-way split (>=2 parallel grid steps) and small-tile multi-step
    # grid (exercises remainder padding + lane-dim-128 tile rounding).
    vel_2core = jax.block_until_ready(
        actor_forward(obs_big, params, num_cores=2, use_bf16=False))
    assert jnp.allclose(vel_2core, ref_big, atol=1e-4, rtol=1e-4)
    vel_tiled = jax.block_until_ready(
        actor_forward(obs_big, params, batch_tile=128, use_bf16=False))
    assert jnp.allclose(vel_tiled, ref_big, atol=1e-4, rtol=1e-4)

    print("KERNEL_OK")
</pallas_src>

<mosaic_0001>
module attributes {stable_mosaic.version = 11 : i64} {
  func.func @_actor_kernel(%arg0: i32, %arg1: memref<16x24xf32, #tpu.memory_space<vmem>>, %arg2: memref<24x256xf32, #tpu.memory_space<vmem>>, %arg3: memref<1x256xf32, #tpu.memory_space<vmem>>, %arg4: memref<256x256xf32, #tpu.memory_space<vmem>>, %arg5: memref<1x256xf32, #tpu.memory_space<vmem>>, %arg6: memref<2x256xf32, #tpu.memory_space<vmem>>, %arg7: memref<2x1xf32, #tpu.memory_space<vmem>>, %arg8: memref<2x16xf32, #tpu.memory_space<vmem>>) attributes {dimension_semantics = [#tpu.dimension_semantics<parallel>], iteration_bounds = array<i64: 1>, scalar_prefetch = 0 : i64, scratch_operands = 0 : i64, tpu.core_type = #tpu.core_type<tc>, window_params = [{transform_indices = @transform_0, window_bounds = array<i64: 16, 24>}, {pipeline_mode = #tpu.pipeline_mode<synchronous>, transform_indices = @transform_1, window_bounds = array<i64: 24, 256>}, {pipeline_mode = #tpu.pipeline_mode<synchronous>, transform_indices = @transform_2, window_bounds = array<i64: 1, 256>}, {pipeline_mode = #tpu.pipeline_mode<synchronous>, transform_indices = @transform_3, window_bounds = array<i64: 256, 256>}, {pipeline_mode = #tpu.pipeline_mode<synchronous>, transform_indices = @transform_4, window_bounds = array<i64: 1, 256>}, {pipeline_mode = #tpu.pipeline_mode<synchronous>, transform_indices = @transform_5, window_bounds = array<i64: 2, 256>}, {pipeline_mode = #tpu.pipeline_mode<synchronous>, transform_indices = @transform_6, window_bounds = array<i64: 2, 1>}, {transform_indices = @transform_7, window_bounds = array<i64: 2, 16>}]} {
    %c0 = arith.constant 0 : index
    %c0_0 = arith.constant 0 : index
    %0 = vector.load %arg1[%c0, %c0_0] : memref<16x24xf32, #tpu.memory_space<vmem>>, vector<16x24xf32>
    %c0_1 = arith.constant 0 : index
    %c0_2 = arith.constant 0 : index
    %1 = vector.load %arg2[%c0_1, %c0_2] : memref<24x256xf32, #tpu.memory_space<vmem>>, vector<24x256xf32>
    %cst = arith.constant dense<0.000000e+00> : vector<16x256xf32>
    %2 = tpu.matmul %0, %1, %cst {dimension_numbers = #tpu.dot_dimension_numbers<[1], [0], [0], [1], [0, 0, 1, 1], [], []>} : vector<16x24xf32>, vector<24x256xf32>, vector<16x256xf32> -> vector<16x256xf32>
    %c0_3 = arith.constant 0 : index
    %c0_4 = arith.constant 0 : index
    %3 = vector.load %arg3[%c0_3, %c0_4] : memref<1x256xf32, #tpu.memory_space<vmem>>, vector<1x256xf32>
    %4 = vector.broadcast %3 : vector<1x256xf32> to vector<16x256xf32>
    %5 = arith.addf %2, %4 : vector<16x256xf32>
    %cst_5 = arith.constant 0.000000e+00 : f32
    %6 = vector.broadcast %cst_5 : f32 to vector<16x256xf32>
    %7 = arith.maximumf %5, %6 : vector<16x256xf32>
    %c0_6 = arith.constant 0 : index
    %c0_7 = arith.constant 0 : index
    %8 = vector.load %arg4[%c0_6, %c0_7] : memref<256x256xf32, #tpu.memory_space<vmem>>, vector<256x256xf32>
    %cst_8 = arith.constant dense<0.000000e+00> : vector<16x256xf32>
    %9 = tpu.matmul %7, %8, %cst_8 {dimension_numbers = #tpu.dot_dimension_numbers<[1], [0], [0], [1], [0, 0, 1, 1], [], []>} : vector<16x256xf32>, vector<256x256xf32>, vector<16x256xf32> -> vector<16x256xf32>
    %c0_9 = arith.constant 0 : index
    %c0_10 = arith.constant 0 : index
    %10 = vector.load %arg5[%c0_9, %c0_10] : memref<1x256xf32, #tpu.memory_space<vmem>>, vector<1x256xf32>
    %11 = vector.broadcast %10 : vector<1x256xf32> to vector<16x256xf32>
    %12 = arith.addf %9, %11 : vector<16x256xf32>
    %cst_11 = arith.constant 0.000000e+00 : f32
    %13 = vector.broadcast %cst_11 : f32 to vector<16x256xf32>
    %14 = arith.maximumf %12, %13 : vector<16x256xf32>
    %c0_12 = arith.constant 0 : index
    %c0_13 = arith.constant 0 : index
    %15 = vector.load %arg6[%c0_12, %c0_13] : memref<2x256xf32, #tpu.memory_space<vmem>>, vector<2x256xf32>
    %cst_14 = arith.constant dense<0.000000e+00> : vector<2x16xf32>
    %16 = tpu.matmul %15, %14, %cst_14 {dimension_numbers = #tpu.dot_dimension_numbers<[1], [1], [0], [0], [0, 0, 1, 0], [], []>} : vector<2x256xf32>, vector<16x256xf32>, vector<2x16xf32> -> vector<2x16xf32>
    %c0_15 = arith.constant 0 : index
    %c0_16 = arith.constant 0 : index
    %17 = vector.load %arg7[%c0_15, %c0_16] : memref<2x1xf32, #tpu.memory_space<vmem>>, vector<2x1xf32>
    %18 = vector.broadcast %17 : vector<2x1xf32> to vector<2x16xf32>
    %19 = arith.addf %16, %18 : vector<2x16xf32>
    %20 = math.absf %19 : vector<2x16xf32>
    %cst_17 = arith.constant 0.000000e+00 : f32
    %21 = vector.broadcast %cst_17 : f32 to vector<2x16xf32>
    %22 = arith.subf %21, %20 : vector<2x16xf32>
    %23 = math.exp %22 : vector<2x16xf32>
    %cst_18 = arith.constant 1.000000e+00 : f32
    %24 = vector.broadcast %cst_18 : f32 to vector<2x16xf32>
    %25 = arith.addf %24, %23 : vector<2x16xf32>
    %cst_19 = arith.constant 1.000000e+00 : f32
    %26 = vector.broadcast %cst_19 : f32 to vector<2x16xf32>
    %27 = arith.divf %26, %25 : vector<2x16xf32>
    %cst_20 = arith.constant 0.000000e+00 : f32
    %28 = vector.broadcast %cst_20 : f32 to vector<2x16xf32>
    %29 = arith.cmpf oge, %19, %28 : vector<2x16xf32>
    %30 = arith.mulf %23, %27 : vector<2x16xf32>
    %31 = arith.select %29, %27, %30 : vector<2x16xi1>, vector<2x16xf32>
    %32 = tpu.iota {dimensions = array<i32: 0>} : vector<2x16xi32>
    %c0_i32 = arith.constant 0 : i32
    %33 = vector.broadcast %c0_i32 : i32 to vector<2x16xi32>
    %34 = arith.cmpi eq, %32, %33 : vector<2x16xi32>
    %35 = math.tanh %19 : vector<2x16xf32>
    %36 = arith.select %34, %31, %35 : vector<2x16xi1>, vector<2x16xf32>
    %c0_21 = arith.constant 0 : index
    %c0_22 = arith.constant 0 : index
    %37 = vector.load %arg8[%c0_21, %c0_22] : memref<2x16xf32, #tpu.memory_space<vmem>>, vector<2x16xf32>
    tpu.vector_store %arg8[%c0_21, %c0_22], %36 {strides = array<i32>} : memref<2x16xf32, #tpu.memory_space<vmem>>, vector<2x16xf32>,
    return
  }
  func.func @transform_0(%arg0: i32) -> (i32, i32) {
    %c0_i32 = arith.constant 0 : i32
    %c0_i32_0 = arith.constant 0 : i32
    return %arg0, %c0_i32 : i32, i32
  }
  func.func @transform_1(%arg0: i32) -> (i32, i32) {
    %c0_i32 = arith.constant 0 : i32
    %c0_i32_0 = arith.constant 0 : i32
    %c0_i32_1 = arith.constant 0 : i32
    return %c0_i32, %c0_i32_0 : i32, i32
  }
  func.func @transform_2(%arg0: i32) -> (i32, i32) {
    %c0_i32 = arith.constant 0 : i32
    %c0_i32_0 = arith.constant 0 : i32
    %c0_i32_1 = arith.constant 0 : i32
    return %c0_i32, %c0_i32_0 : i32, i32
  }
  func.func @transform_3(%arg0: i32) -> (i32, i32) {
    %c0_i32 = arith.constant 0 : i32
    %c0_i32_0 = arith.constant 0 : i32
    %c0_i32_1 = arith.constant 0 : i32
    return %c0_i32, %c0_i32_0 : i32, i32
  }
  func.func @transform_4(%arg0: i32) -> (i32, i32) {
    %c0_i32 = arith.constant 0 : i32
    %c0_i32_0 = arith.constant 0 : i32
    %c0_i32_1 = arith.constant 0 : i32
    return %c0_i32, %c0_i32_0 : i32, i32
  }
  func.func @transform_5(%arg0: i32) -> (i32, i32) {
    %c0_i32 = arith.constant 0 : i32
    %c0_i32_0 = arith.constant 0 : i32
    %c0_i32_1 = arith.constant 0 : i32
    return %c0_i32, %c0_i32_0 : i32, i32
  }
  func.func @transform_6(%arg0: i32) -> (i32, i32) {
    %c0_i32 = arith.constant 0 : i32
    %c0_i32_0 = arith.constant 0 : i32
    %c0_i32_1 = arith.constant 0 : i32
    return %c0_i32, %c0_i32_0 : i32, i32
  }
  func.func @transform_7(%arg0: i32) -> (i32, i32) {
    %c0_i32 = arith.constant 0 : i32
    %c0_i32_0 = arith.constant 0 : i32
    return %c0_i32, %arg0 : i32, i32
  }
}

</mosaic_0001>

<llo_original>
// kernel: actor_forward.1
$region0: #{actor_forward.1}
  #allocation0 [shape = 'u32[]', space=smem, size = 0x4, offset = 0x4, fixed_abs, tag = 'smem constant byte address 0x4 - core index']
  #allocation1 [shape = 'u32[144,128]{1,0:T(1,128)}', space=vmem, size = 0x12000, scoped, tag = 'internal scratch']
  %s0 = inlined_call_operand.vmem [shape: f32[16,24], index: 0, kind: input, shape index: {}]
  %s1 = inlined_call_operand.vmem [shape: f32[24,256], index: 1, kind: input, shape index: {}]
  %s2 = inlined_call_operand.vmem [shape: f32[1,256], index: 2, kind: input, shape index: {}]
  %s3 = inlined_call_operand.hbm [shape: f32[256,256], index: 3, kind: input, shape index: {}]
  %s4 = inlined_call_operand.vmem [shape: f32[1,256], index: 4, kind: input, shape index: {}]
  %s5 = inlined_call_operand.vmem [shape: f32[2,256], index: 5, kind: input, shape index: {}]
  %s6 = inlined_call_operand.vmem [shape: f32[2,1], index: 6, kind: input, shape index: {}]
  %s7 = inlined_call_operand.vmem [shape: f32[2,16], index: 7, kind: output, shape index: {}]
  %s8 = sld [smem:[#allocation0]]
  $region42: #{actor_forward.1} parent=0
    _
  %s10 = ssub.s32 1, %s8
  %s11 = scalar_select 0, %s10, %s8
  $region1: #{actor_forward.1} parent=0
    #allocation2 [shape = 'u8[262144]{0}', space=vmem, size = 0x40000, scoped, tag = 'input window, operand 3, single buffered']
    #allocation3 [shape = 's32[1]{0}', space=sflag, size = 0x4, scoped, tag = 'scoped memory for actor_forward.1']
    %12 = vsyncpa [#allocation3], 0
    // Predicated region
    $region2: #{actor_forward.1} parent=1 // pred_check
      _
    $region3: #{actor_forward.1} parent=1 // pred_check_branch
      %14 = sbr.rel (0) target = $region5
    $region4: #{actor_forward.1} parent=1 // pred_region
      _
    $region5: #{actor_forward.1} parent=1 // pred_fallthru
      _
    // Predicated region
    $region6: #{actor_forward.1} parent=1 // pred_check
      _
    $region7: #{actor_forward.1} parent=1 // pred_check_branch
      %16 = sbr.rel (0) target = $region9
    $region8: #{actor_forward.1} parent=1 // pred_region
      _
    $region9: #{actor_forward.1} parent=1 // pred_fallthru
      _
    // Predicated region
    $region10: #{actor_forward.1} parent=1 // pred_check
      _
    $region11: #{actor_forward.1} parent=1 // pred_check_branch
      %18 = sbr.rel (0) target = $region13
    $region12: #{actor_forward.1} parent=1 // pred_region
      _
    $region13: #{actor_forward.1} parent=1 // pred_fallthru
      _
    // Predicated region
    $region14: #{actor_forward.1} parent=1 // pred_check
      _
    $region15: #{actor_forward.1} parent=1 // pred_check_branch
      %20 = sbr.rel (0) target = $region17
    $region16: #{actor_forward.1} parent=1 // pred_region
      %s22 = ssub.s32 8192, 8192
      %23 = vsyncadd [#allocation3], %s22
      %s24 = sshll.u32 [#allocation2], 4
      %s25 = int_to_ptr.vmem [resolvable:$true] %s24
      %30 = dma.hbm_to_vmem [thread:$0]  %s3, 8192, %s25, [#allocation3], 256, 256, 16
    $region17: #{actor_forward.1} parent=1 // pred_fallthru
      _
    // Predicated region
    $region18: #{actor_forward.1} parent=1 // pred_check
      _
    $region19: #{actor_forward.1} parent=1 // pred_check_branch
      %32 = sbr.rel (0) target = $region21
    $region20: #{actor_forward.1} parent=1 // pred_region
      _
    $region21: #{actor_forward.1} parent=1 // pred_fallthru
      _
    // Predicated region
    $region22: #{actor_forward.1} parent=1 // pred_check
      _
    $region23: #{actor_forward.1} parent=1 // pred_check_branch
      %34 = sbr.rel (0) target = $region25
    $region24: #{actor_forward.1} parent=1 // pred_region
      _
    $region25: #{actor_forward.1} parent=1 // pred_fallthru
      _
    // Predicated region
    $region26: #{actor_forward.1} parent=1 // pred_check
      _
    $region27: #{actor_forward.1} parent=1 // pred_check_branch
      %36 = sbr.rel (0) target = $region29
    $region28: #{actor_forward.1} parent=1 // pred_region
      _
    $region29: #{actor_forward.1} parent=1 // pred_fallthru
      _
    // Predicated region
    $region30: #{actor_forward.1} parent=1 // pred_check
      _
    $region31: #{actor_forward.1} parent=1 // pred_check_branch
      %38 = sbr.rel (0) target = $region33
    $region32: #{actor_forward.1} parent=1 // pred_region
      %39 = dma.done [#allocation3], 8192
    $region33: #{actor_forward.1} parent=1 // pred_fallthru
      _
    %v40 = vld [vmem:[%s0] sm:$0xff]
    %v41 = vld [vmem:[%s0 + $0x8] sm:$0xff]
    %v42 = vld [vmem:[%s1] sm:$0xff]
    %v43 = vld [vmem:[%s1 + $0x8] sm:$0xff]
    %v44 = vld [vmem:[%s1 + $0x10] sm:$0xff]
    %v45 = vld [vmem:[%s1 + $0x18] sm:$0xff]
    %v46 = vld [vmem:[%s1 + $0x20] sm:$0xff]
    %v47 = vld [vmem:[%s1 + $0x28] sm:$0xff]
    %v48 = vld [vmem:[%s2] sm:$0x3]
    %v50 = vlaneseq
    %v51 = vshrl.u32 %v50, 7
    %v52 = vsub.s32 0, %v51
    %v53 = vrot.slane %v48, %v52
    %v54 = vlaneseq
    %v55 = vshrl.u32 %v54, 7
    %v56 = vsub.s32 1, %v55
    %v57 = vrot.slane %v48, %v56
    %vm60 = vcmask 195584
    %v62 = vsel %vm60, %v40, 0
    %v65 = vsel %vm60, %v41, 0
    %67 = vmatprep.subr.mxu0 %v43
    %68 = vmatpush1.msra.mxu0 %v42
    %69 = vmatprep.subr.mxu0 %v45
    %70 = vmatpush1.msra.mxu0 %v44
    %71 = vmatprep.subr.mxu0 %v47
    %72 = vmatpush1.msra.mxu0 %v46
    %73 = vmatprep.subr.mxu0 0.0
    %74 = vmatpush1.msra.mxu0 0.0
    %75 = vmatprep.subr.mxu0 0.0
    %76 = vmatpush1.msra.mxu0 0.0
    %77 = vmatprep.subr.mxu0 0.0
    %78 = vmatpush1.msra.mxu0 0.0
    %79 = vmatprep.subr.mxu0 0.0
    %80 = vmatpush1.msra.mxu0 0.0
    %81 = vmatprep.subr.mxu0 0.0
    %82 = vmatpush1.msra.mxu0 0.0
    %83 = vmatprep.subr.mxu0 0.0
    %84 = vmatpush1.msra.mxu0 0.0
    %85 = vmatprep.subr.mxu0 0.0
    %86 = vmatpush1.msra.mxu0 0.0
    %87 = vmatprep.subr.mxu0 0.0
    %88 = vmatpush1.msra.mxu0 0.0
    %89 = vmatprep.subr.mxu0 0.0
    %90 = vmatpush1.msra.mxu0 0.0
    %91 = vmatprep.subr.mxu0 0.0
    %92 = vmatpush1.msra.mxu0 0.0
    %93 = vmatprep.subr.mxu0 0.0
    %94 = vmatpush1.msra.mxu0 0.0
    %95 = vmatprep.subr.mxu0 0.0
    %96 = vmatpush1.msra.mxu0 0.0
    %97 = vmatprep.subr.mxu0 0.0
    %98 = vmatpush1.msra.mxu0 0.0
    %99 = vmatprep.subr.mxu0 0.0
    %100 = vmatpush1.msra.mxu0 0.0
    %101 = vmatprep.subr.mxu0 0.0
    %102 = vmatpush1.msra.mxu0 0.0
    %103 = vmatprep.subr.mxu0 0.0
    %104 = vmatpush1.msra.mxu0 0.0
    %105 = vmatprep.subr.mxu0 0.0
    %106 = vmatpush1.msra.mxu0 0.0
    %107 = vmatprep.subr.mxu0 0.0
    %108 = vmatpush1.msra.mxu0 0.0
    %109 = vmatprep.subr.mxu0 0.0
    %110 = vmatpush1.msra.mxu0 0.0
    %111 = vmatprep.subr.mxu0 0.0
    %112 = vmatpush1.msra.mxu0 0.0
    %113 = vmatprep.subr.mxu0 0.0
    %114 = vmatpush1.msra.mxu0 0.0
    %115 = vmatprep.subr.mxu0 0.0
    %116 = vmatpush1.msra.mxu0 0.0
    %117 = vmatprep.subr.mxu0 0.0
    %118 = vmatpush1.msra.mxu0 0.0
    %119 = vmatprep.subr.mxu0 0.0
    %120 = vmatpush1.msra.mxu0 0.0
    %121 = vmatprep.subr.mxu0 0.0
    %122 = vmatpush1.msra.mxu0 0.0
    %123 = vmatprep.subr.mxu0 0.0
    %124 = vmatpush1.msra.mxu0 0.0
    %125 = vmatprep.subr.mxu0 0.0
    %126 = vmatpush1.msra.mxu0 0.0
    %127 = vmatprep.subr.mxu0 0.0
    %128 = vmatpush1.msra.mxu0 0.0
    %129 = vmatprep.subr.mxu0 0.0
    %130 = vmatpush1.msra.mxu0 0.0
    %131 = vmatprep.mubr.f32.mxu0 0.0
    %132 = vmatmul.mubr.f32.gmra.mrb[0].mxu0 %v62
    %v133 = vpop.f32.mrb[0].mxu0
    %v134 = vadd.f32 %v53, %v133
    %v135 = vpop.f32.mrb[0].mxu0
    %v136 = vadd.f32 %v57, %v135
    %137 = vmatprep.mubr.f32.mxu0 0.0
    %138 = vmatmul.mubr.f32.gmra.mrb[0].mxu0 %v65
    %v139 = vpop.f32.mrb[0].mxu0
    %v140 = vadd.f32 %v53, %v139
    %v141 = vpop.f32.mrb[0].mxu0
    %v142 = vadd.f32 %v57, %v141
    %143 = vdwg.mxu0
    %v144 = vmax.f32 %v134, 0.0
    %v145 = vmax.f32 %v136, 0.0
    %v146 = vmax.f32 %v140, 0.0
    %v147 = vmax.f32 %v142, 0.0
    %v148 = vld [vmem:[#allocation2] sm:$0xff]
    %v149 = vld [vmem:[#allocation2 + $0x8] sm:$0xff]
    %v150 = vld [vmem:[#allocation2 + $0x10] sm:$0xff]
    %v151 = vld [vmem:[#allocation2 + $0x18] sm:$0xff]
    %v152 = vld [vmem:[#allocation2 + $0x20] sm:$0xff]
    %v153 = vld [vmem:[#allocation2 + $0x28] sm:$0xff]
    %v154 = vld [vmem:[#allocation2 + $0x30] sm:$0xff]
    %v155 = vld [vmem:[#allocation2 + $0x38] sm:$0xff]
    %v156 = vld [vmem:[#allocation2 + $0x40] sm:$0xff]
    %v157 = vld [vmem:[#allocation2 + $0x48] sm:$0xff]
    %v158 = vld [vmem:[#allocation2 + $0x50] sm:$0xff]
    %v159 = vld [vmem:[#allocation2 + $0x58] sm:$0xff]
    %v160 = vld [vmem:[#allocation2 + $0x60] sm:$0xff]
    %v161 = vld [vmem:[#allocation2 + $0x68] sm:$0xff]
    %v162 = vld [vmem:[#allocation2 + $0x70] sm:$0xff]
    %v163 = vld [vmem:[#allocation2 + $0x78] sm:$0xff]
    %v164 = vld [vmem:[#allocation2 + $0x80] sm:$0xff]
    %v165 = vld [vmem:[#allocation2 + $0x88] sm:$0xff]
    %v166 = vld [vmem:[#allocation2 + $0x90] sm:$0xff]
    %v167 = vld [vmem:[#allocation2 + $0x98] sm:$0xff]
    %v168 = vld [vmem:[#allocation2 + $0xa0] sm:$0xff]
    %v169 = vld [vmem:[#allocation2 + $0xa8] sm:$0xff]
    %v170 = vld [vmem:[#allocation2 + $0xb0] sm:$0xff]
    %v171 = vld [vmem:[#allocation2 + $0xb8] sm:$0xff]
    %v172 = vld [vmem:[#allocation2 + $0xc0] sm:$0xff]
    %v173 = vld [vmem:[#allocation2 + $0xc8] sm:$0xff]
    %v174 = vld [vmem:[#allocation2 + $0xd0] sm:$0xff]
    %v175 = vld [vmem:[#allocation2 + $0xd8] sm:$0xff]
    %v176 = vld [vmem:[#allocation2 + $0xe0] sm:$0xff]
    %v177 = vld [vmem:[#allocation2 + $0xe8] sm:$0xff]
    %v178 = vld [vmem:[#allocation2 + $0xf0] sm:$0xff]
    %v179 = vld [vmem:[#allocation2 + $0xf8] sm:$0xff]
    %v180 = vld [vmem:[#allocation2 + $0x100] sm:$0xff]
    %v181 = vld [vmem:[#allocation2 + $0x108] sm:$0xff]
    %v182 = vld [vmem:[#allocation2 + $0x110] sm:$0xff]
    %v183 = vld [vmem:[#allocation2 + $0x118] sm:$0xff]
    %v184 = vld [vmem:[#allocation2 + $0x120] sm:$0xff]
    %v185 = vld [vmem:[#allocation2 + $0x128] sm:$0xff]
    %v186 = vld [vmem:[#allocation2 + $0x130] sm:$0xff]
    %v187 = vld [vmem:[#allocation2 + $0x138] sm:$0xff]
    %v188 = vld [vmem:[#allocation2 + $0x140] sm:$0xff]
    %v189 = vld [vmem:[#allocation2 + $0x148] sm:$0xff]
    %v190 = vld [vmem:[#allocation2 + $0x150] sm:$0xff]
    %v191 = vld [vmem:[#allocation2 + $0x158] sm:$0xff]
    %v192 = vld [vmem:[#allocation2 + $0x160] sm:$0xff]
    %v193 = vld [vmem:[#allocation2 + $0x168] sm:$0xff]
    %v194 = vld [vmem:[#allocation2 + $0x170] sm:$0xff]
    %v195 = vld [vmem:[#allocation2 + $0x178] sm:$0xff]
    %v196 = vld [vmem:[#allocation2 + $0x180] sm:$0xff]
    %v197 = vld [vmem:[#allocation2 + $0x188] sm:$0xff]
    %v198 = vld [vmem:[#allocation2 + $0x190] sm:$0xff]
    %v199 = vld [vmem:[#allocation2 + $0x198] sm:$0xff]
    %v200 = vld [vmem:[#allocation2 + $0x1a0] sm:$0xff]
    %v201 = vld [vmem:[#allocation2 + $0x1a8] sm:$0xff]
    %v202 = vld [vmem:[#allocation2 + $0x1b0] sm:$0xff]
    %v203 = vld [vmem:[#allocation2 + $0x1b8] sm:$0xff]
    %v204 = vld [vmem:[#allocation2 + $0x1c0] sm:$0xff]
    %v205 = vld [vmem:[#allocation2 + $0x1c8] sm:$0xff]
    %v206 = vld [vmem:[#allocation2 + $0x1d0] sm:$0xff]
    %v207 = vld [vmem:[#allocation2 + $0x1d8] sm:$0xff]
    %v208 = vld [vmem:[#allocation2 + $0x1e0] sm:$0xff]
    %v209 = vld [vmem:[#allocation2 + $0x1e8] sm:$0xff]
    %v210 = vld [vmem:[#allocation2 + $0x1f0] sm:$0xff]
    %v211 = vld [vmem:[#allocation2 + $0x1f8] sm:$0xff]
    %v212 = vld [vmem:[%s4] sm:$0x3]
    %v214 = vlaneseq
    %v215 = vshrl.u32 %v214, 7
    %v216 = vsub.s32 0, %v215
    %v217 = vrot.slane %v212, %v216
    %v218 = vlaneseq
    %v219 = vshrl.u32 %v218, 7
    %v220 = vsub.s32 1, %v219
    %v221 = vrot.slane %v212, %v220
    %224 = vmatprep.subr.mxu0 %v149
    %225 = vmatpush1.msra.mxu0 %v148
    %226 = vmatprep.subr.mxu0 %v151
    %227 = vmatpush1.msra.mxu0 %v150
    %228 = vmatprep.subr.mxu0 %v153
    %229 = vmatpush1.msra.mxu0 %v152
    %230 = vmatprep.subr.mxu0 %v155
    %231 = vmatpush1.msra.mxu0 %v154
    %232 = vmatprep.subr.mxu0 %v157
    %233 = vmatpush1.msra.mxu0 %v156
    %234 = vmatprep.subr.mxu0 %v159
    %235 = vmatpush1.msra.mxu0 %v158
    %236 = vmatprep.subr.mxu0 %v161
    %237 = vmatpush1.msra.mxu0 %v160
    %238 = vmatprep.subr.mxu0 %v163
    %239 = vmatpush1.msra.mxu0 %v162
    %240 = vmatprep.subr.mxu0 %v165
    %241 = vmatpush1.msra.mxu0 %v164
    %242 = vmatprep.subr.mxu0 %v167
    %243 = vmatpush1.msra.mxu0 %v166
    %244 = vmatprep.subr.mxu0 %v169
    %245 = vmatpush1.msra.mxu0 %v168
    %246 = vmatprep.subr.mxu0 %v171
    %247 = vmatpush1.msra.mxu0 %v170
    %248 = vmatprep.subr.mxu0 %v173
    %249 = vmatpush1.msra.mxu0 %v172
    %250 = vmatprep.subr.mxu0 %v175
    %251 = vmatpush1.msra.mxu0 %v174
    %252 = vmatprep.subr.mxu0 %v177
    %253 = vmatpush1.msra.mxu0 %v176
    %254 = vmatprep.subr.mxu0 %v179
    %255 = vmatpush1.msra.mxu0 %v178
    %256 = vmatprep.subr.mxu0 %v181
    %257 = vmatpush1.msra.mxu0 %v180
    %258 = vmatprep.subr.mxu0 %v183
    %259 = vmatpush1.msra.mxu0 %v182
    %260 = vmatprep.subr.mxu0 %v185
    %261 = vmatpush1.msra.mxu0 %v184
    %262 = vmatprep.subr.mxu0 %v187
    %263 = vmatpush1.msra.mxu0 %v186
    %264 = vmatprep.subr.mxu0 %v189
    %265 = vmatpush1.msra.mxu0 %v188
    %266 = vmatprep.subr.mxu0 %v191
    %267 = vmatpush1.msra.mxu0 %v190
    %268 = vmatprep.subr.mxu0 %v193
    %269 = vmatpush1.msra.mxu0 %v192
    %270 = vmatprep.subr.mxu0 %v195
    %271 = vmatpush1.msra.mxu0 %v194
    %272 = vmatprep.subr.mxu0 %v197
    %273 = vmatpush1.msra.mxu0 %v196
    %274 = vmatprep.subr.mxu0 %v199
    %275 = vmatpush1.msra.mxu0 %v198
    %276 = vmatprep.subr.mxu0 %v201
    %277 = vmatpush1.msra.mxu0 %v200
    %278 = vmatprep.subr.mxu0 %v203
    %279 = vmatpush1.msra.mxu0 %v202
    %280 = vmatprep.subr.mxu0 %v205
    %281 = vmatpush1.msra.mxu0 %v204
    %282 = vmatprep.subr.mxu0 %v207
    %283 = vmatpush1.msra.mxu0 %v206
    %284 = vmatprep.subr.mxu0 %v209
    %285 = vmatpush1.msra.mxu0 %v208
    %286 = vmatprep.subr.mxu0 %v211
    %287 = vmatpush1.msra.mxu0 %v210
    %288 = vmatprep.mubr.f32.mxu0 %v145
    %289 = vmatmul.mubr.f32.gmra.mrb[0].mxu0 %v144
    %v290 = vpop.f32.mrb[0].mxu0
    %v291 = vadd.f32 %v217, %v290
    %v292 = vpop.f32.mrb[0].mxu0
    %v293 = vadd.f32 %v221, %v292
    %294 = vmatprep.mubr.f32.mxu0 %v147
    %295 = vmatmul.mubr.f32.gmra.mrb[0].mxu0 %v146
    %v296 = vpop.f32.mrb[0].mxu0
    %v297 = vadd.f32 %v217, %v296
    %v298 = vpop.f32.mrb[0].mxu0
    %v299 = vadd.f32 %v221, %v298
    %300 = vdwg.mxu0
    %v301 = vmax.f32 %v291, 0.0
    %v302 = vmax.f32 %v293, 0.0
    %v303 = vmax.f32 %v297, 0.0
    %v304 = vmax.f32 %v299, 0.0
    %v305 = vld [vmem:[%s5] sm:$0xf]
    %v306 = vld [vmem:[%s6] sm:$0x3]
    %308 = vset.pattern.permute.xlu0 0
    %309 = vperm.xlu0 %308, %v306
    %v310 = vpop.permute.xlu0 %309
    %v314 = vunpack.c.l.s4 1983009808
    %v315 = vunpack.c.0.s8 %v314
    %v316 = vlaneseq
    %v317 = vshrl.u32 %v316, 7
    %v318 = vsub.s32 %v315, %v317
    %v319 = vrot.slane %v305, %v318
    %v320 = vcombine.high %v319, %v319
    %323 = vmatprep.subr.mxu0 %v302
    %324 = vmatpush1.xpose.msra.mxu0 %v301
    %325 = vmatprep.subr.mxu0 %v304
    %326 = vmatpush1.xpose.msra.mxu0 %v303
    %327 = vmatprep.subr.mxu0 0.0
    %328 = vmatpush1.xpose.msra.mxu0 0.0
    %329 = vmatprep.subr.mxu0 0.0
    %330 = vmatpush1.xpose.msra.mxu0 0.0
    %331 = vmatprep.subr.mxu0 0.0
    %332 = vmatpush1.xpose.msra.mxu0 0.0
    %333 = vmatprep.subr.mxu0 0.0
    %334 = vmatpush1.xpose.msra.mxu0 0.0
    %335 = vmatprep.subr.mxu0 0.0
    %336 = vmatpush1.xpose.msra.mxu0 0.0
    %337 = vmatprep.subr.mxu0 0.0
    %338 = vmatpush1.xpose.msra.mxu0 0.0
    %339 = vmatprep.subr.mxu0 0.0
    %340 = vmatpush1.xpose.msra.mxu0 0.0
    %341 = vmatprep.subr.mxu0 0.0
    %342 = vmatpush1.xpose.msra.mxu0 0.0
    %343 = vmatprep.subr.mxu0 0.0
    %344 = vmatpush1.xpose.msra.mxu0 0.0
    %345 = vmatprep.subr.mxu0 0.0
    %346 = vmatpush1.xpose.msra.mxu0 0.0
    %347 = vmatprep.subr.mxu0 0.0
    %348 = vmatpush1.xpose.msra.mxu0 0.0
    %349 = vmatprep.subr.mxu0 0.0
    %350 = vmatpush1.xpose.msra.mxu0 0.0
    %351 = vmatprep.subr.mxu0 0.0
    %352 = vmatpush1.xpose.msra.mxu0 0.0
    %353 = vmatprep.subr.mxu0 0.0
    %354 = vmatpush1.xpose.msra.mxu0 0.0
    %355 = vmatprep.subr.mxu0 0.0
    %356 = vmatpush1.xpose.msra.mxu0 0.0
    %357 = vmatprep.subr.mxu0 0.0
    %358 = vmatpush1.xpose.msra.mxu0 0.0
    %359 = vmatprep.subr.mxu0 0.0
    %360 = vmatpush1.xpose.msra.mxu0 0.0
    %361 = vmatprep.subr.mxu0 0.0
    %362 = vmatpush1.xpose.msra.mxu0 0.0
    %363 = vmatprep.subr.mxu0 0.0
    %364 = vmatpush1.xpose.msra.mxu0 0.0
    %365 = vmatprep.subr.mxu0 0.0
    %366 = vmatpush1.xpose.msra.mxu0 0.0
    %367 = vmatprep.subr.mxu0 0.0
    %368 = vmatpush1.xpose.msra.mxu0 0.0
    %369 = vmatprep.subr.mxu0 0.0
    %370 = vmatpush1.xpose.msra.mxu0 0.0
    %371 = vmatprep.subr.mxu0 0.0
    %372 = vmatpush1.xpose.msra.mxu0 0.0
    %373 = vmatprep.subr.mxu0 0.0
    %374 = vmatpush1.xpose.msra.mxu0 0.0
    %375 = vmatprep.subr.mxu0 0.0
    %376 = vmatpush1.xpose.msra.mxu0 0.0
    %377 = vmatprep.subr.mxu0 0.0
    %378 = vmatpush1.xpose.msra.mxu0 0.0
    %379 = vmatprep.subr.mxu0 0.0
    %380 = vmatpush1.xpose.msra.mxu0 0.0
    %381 = vmatprep.subr.mxu0 0.0
    %382 = vmatpush1.xpose.msra.mxu0 0.0
    %383 = vmatprep.subr.mxu0 0.0
    %384 = vmatpush1.xpose.msra.mxu0 0.0
    %385 = vmatprep.subr.mxu0 0.0
    %386 = vmatpush1.xpose.msra.mxu0 0.0
    %387 = vmatprep.mubr.f32.mxu0 %v320
    %388 = vmatmul.mubr.f32.gmra.mrb[0].mxu0 %v319
    %v389 = vpop.f32.mrb[0].mxu0
    %v390 = vadd.f32 %v310, %v389
    %v391 = vpop.f32.mrb[0].mxu0
    %392 = vdwg.mxu0
    %v393 = vand.u32 2147483647, %v390
    %v394 = vsub.f32 0.0, %v393
    %v395 = vmul.f32 %v394, 1.442695
    %v396 = vpow.pop %v395
    %v397 = vadd.f32 %v396, 1.0
    %v398 = vrcp.pop %v397
    %v399 = vmul.f32 1.0, %v398
    %vm400 = vcmp.ge.f32.partialorder %v390, 0.0
    %v401 = vmul.f32 %v396, %v399
    %v402 = vsel %vm400, %v399, %v401
    %v403 = vlaneseq
    %v404 = vshrl.u32 %v403, 7
    %vm405 = vcmp.eq.s32.totalorder %v404, 0
    %v406 = vtanh.pop %v390
    %v407 = vsel %vm405, %v402, %v406
    %vm408 = vcmask 123904
    %409 = vst.msk [vmem:[%s7] sm:$0x3] %vm408, %v407
    // Predicated region
    $region34: #{actor_forward.1} parent=1 // pred_check
      _
    $region35: #{actor_forward.1} parent=1 // pred_check_branch
      %411 = sbr.rel (0) target = $region37
    $region36: #{actor_forward.1} parent=1 // pred_region
      _
    $region37: #{actor_forward.1} parent=1 // pred_fallthru
      _
    // Predicated region
    $region38: #{actor_forward.1} parent=1 // pred_check
      _
    $region39: #{actor_forward.1} parent=1 // pred_check_branch
      %413 = sbr.rel (0) target = $region41
    $region40: #{actor_forward.1} parent=1 // pred_region
      _
    $region41: #{actor_forward.1} parent=1 // pred_fallthru
      _
    %414 = vsyncpa [#allocation3], 1

</llo_original>
